<compile_context>
chip_gen: v7x
topology: tpu7x:2x2x1
jax: 0.10.0
libtpu: 0.0.40
codegen_flags: <defaults>
</compile_context>

<pallas_src>
import math
import jax
import jax.numpy as jnp
from jax.experimental import pallas as pl
from jax.experimental.pallas import tpu as pltpu

# ----------------------------- configuration -----------------------------
BATCH   = 2
D_MODEL = 32
SEQ     = 8


# ------------------------------- kernel ----------------------------------
def pos_enc_kernel(x_ref, o_ref):
    """One batch element per grid step.

    x_ref: (d_model, seq) — native PyTorch layout slice (no wrapper transpose).
    o_ref: (seq, d_model) — transposed + positional-encoded output block.
    """
    S, D = o_ref.shape

    # In-kernel NCL -> NLC swap: 2-D minor-dim transpose on the XLU (free slot,
    # no extra HBM pass).
    xt = x_ref[...].T                                               # (S, D)

    # --- sinusoidal table, minimal EUP work -------------------------------
    col = jax.lax.broadcasted_iota(jnp.int32, (1, D), 1)            # feature index d
    pair = (col >> 1).astype(jnp.float32)                           # d // 2
    # exp() only over (1, D) — broadcast along sublanes, not recomputed per row.
    inv_freq = jnp.exp(pair * (-2.0 * math.log(10000.0) / D))       # (1, D)
    # even d -> sin(angle); odd d -> cos(angle) == sin(angle + pi/2): one sin/elem.
    phase = (col & 1).astype(jnp.float32) * (math.pi / 2.0)         # (1, D)

    pos = jax.lax.broadcasted_iota(jnp.int32, (S, 1), 0).astype(jnp.float32)
    pe = jnp.sin(pos * inv_freq + phase)                            # (S, D)

    # nn.Dropout is never applied in forward() -> identity.
    o_ref[...] = (xt + pe).astype(o_ref.dtype)


# ------------------------------- wrapper ----------------------------------
def positional_encoding(x):
    """x: (B, d_model, seq) — exactly the PyTorch forward input layout.
    Returns (B, seq, d_model)."""
    B, D, S = x.shape
    return pl.pallas_call(
        pos_enc_kernel,
        out_shape=jax.ShapeDtypeStruct((B, S, D), x.dtype),
        grid_spec=pltpu.PrefetchScalarGridSpec(
            num_scalar_prefetch=0,
            grid=(B,),                                   # batch axis = grid axis
            in_specs=[pl.BlockSpec((None, D, S), lambda b: (b, 0, 0))],
            out_specs=pl.BlockSpec((None, S, D), lambda b: (b, 0, 0)),
        ),
        compiler_params=pltpu.CompilerParams(
            # independent per-batch work -> shard across TensorCores on v7x
            dimension_semantics=("parallel",)),
    )(x)


# ------------------------------ reference ----------------------------------
def reference(x):
    """Pure-JAX mirror of the PyTorch forward."""
    B, D, S = x.shape
    xt = jnp.transpose(x, (0, 2, 1))
    position = jnp.arange(S, dtype=jnp.float32)[:, None]
    div_term = jnp.exp(jnp.arange(0, D, 2, dtype=jnp.float32)
                       * (-math.log(10000.0) / D))
    pe = jnp.zeros((S, D), jnp.float32)
    pe = pe.at[:, 0::2].set(jnp.sin(position * div_term))
    pe = pe.at[:, 1::2].set(jnp.cos(position * div_term))
    return xt + pe[None]


# --------------------------------- main -------------------------------------
if __name__ == "__main__":
    key = jax.random.PRNGKey(0)
    x = jax.random.normal(key, (BATCH, D_MODEL, SEQ), jnp.float32)

    out = positional_encoding(x)
    out = jax.block_until_ready(out)

    ref = reference(x)
    assert out.shape == (BATCH, SEQ, D_MODEL)
    assert jnp.allclose(out, ref, atol=1e-4, rtol=1e-4), "mismatch vs JAX reference"
    print("KERNEL_OK")
</pallas_src>

<mosaic_0001>
module attributes {stable_mosaic.version = 11 : i64} {
  func.func @pos_enc_kernel(%arg0: i32, %arg1: memref<1x32x8xf32, #tpu.memory_space<vmem>>, %arg2: memref<1x8x32xf32, #tpu.memory_space<vmem>>) attributes {dimension_semantics = [#tpu.dimension_semantics<parallel>], iteration_bounds = array<i64: 2>, scalar_prefetch = 0 : i64, scratch_operands = 0 : i64, tpu.core_type = #tpu.core_type<tc>, window_params = [{transform_indices = @transform_0, window_bounds = array<i64: 1, 32, 8>}, {transform_indices = @transform_1, window_bounds = array<i64: 1, 8, 32>}]} {
    %c0 = arith.constant 0 : index
    %c0_0 = arith.constant 0 : index
    %c0_1 = arith.constant 0 : index
    %0 = vector.load %arg1[%c0, %c0_0, %c0_1] : memref<1x32x8xf32, #tpu.memory_space<vmem>>, vector<1x32x8xf32>
    %1 = vector.shape_cast %0 : vector<1x32x8xf32> to vector<32x8xf32>
    %2 = tpu.transpose %1, [1, 0] : vector<32x8xf32> -> vector<8x32xf32>
    %3 = tpu.iota {dimensions = array<i32: 1>} : vector<1x32xi32>
    %c1_i32 = arith.constant 1 : i32
    %4 = vector.broadcast %c1_i32 : i32 to vector<1x32xi32>
    %5 = arith.shrsi %3, %4 : vector<1x32xi32>
    %6 = arith.sitofp %5 : vector<1x32xi32> to vector<1x32xf32>
    %cst = arith.constant -0.575646281 : f32
    %7 = vector.broadcast %cst : f32 to vector<1x32xf32>
    %8 = arith.mulf %6, %7 : vector<1x32xf32>
    %9 = math.exp %8 : vector<1x32xf32>
    %c1_i32_2 = arith.constant 1 : i32
    %10 = vector.broadcast %c1_i32_2 : i32 to vector<1x32xi32>
    %11 = arith.andi %3, %10 : vector<1x32xi32>
    %12 = arith.sitofp %11 : vector<1x32xi32> to vector<1x32xf32>
    %cst_3 = arith.constant 1.57079637 : f32
    %13 = vector.broadcast %cst_3 : f32 to vector<1x32xf32>
    %14 = arith.mulf %12, %13 : vector<1x32xf32>
    %15 = tpu.iota {dimensions = array<i32: 0>} : vector<8x1xi32>
    %16 = arith.sitofp %15 : vector<8x1xi32> to vector<8x1xf32>
    %17 = vector.broadcast %16 : vector<8x1xf32> to vector<8x32xf32>
    %18 = vector.broadcast %9 : vector<1x32xf32> to vector<8x32xf32>
    %19 = arith.mulf %17, %18 : vector<8x32xf32>
    %20 = vector.broadcast %14 : vector<1x32xf32> to vector<8x32xf32>
    %21 = arith.addf %19, %20 : vector<8x32xf32>
    %22 = math.sin %21 : vector<8x32xf32>
    %23 = arith.addf %2, %22 : vector<8x32xf32>
    %c0_4 = arith.constant 0 : index
    %c0_5 = arith.constant 0 : index
    %c0_6 = arith.constant 0 : index
    %24 = vector.load %arg2[%c0_4, %c0_5, %c0_6] : memref<1x8x32xf32, #tpu.memory_space<vmem>>, vector<1x8x32xf32>
    %25 = vector.shape_cast %24 : vector<1x8x32xf32> to vector<8x32xf32>
    %26 = vector.shape_cast %23 : vector<8x32xf32> to vector<1x8x32xf32>
    tpu.vector_store %arg2[%c0_4, %c0_5, %c0_6], %26 {strides = array<i32>} : memref<1x8x32xf32, #tpu.memory_space<vmem>>, vector<1x8x32xf32>,
    return
  }
  func.func @transform_0(%arg0: i32) -> (i32, i32, i32) {
    %c0_i32 = arith.constant 0 : i32
    %c0_i32_0 = arith.constant 0 : i32
    %c0_i32_1 = arith.constant 0 : i32
    return %arg0, %c0_i32, %c0_i32_0 : i32, i32, i32
  }
  func.func @transform_1(%arg0: i32) -> (i32, i32, i32) {
    %c0_i32 = arith.constant 0 : i32
    %c0_i32_0 = arith.constant 0 : i32
    %c0_i32_1 = arith.constant 0 : i32
    return %arg0, %c0_i32, %c0_i32_0 : i32, i32, i32
  }
}

</mosaic_0001>

<llo_original>
// kernel: tpu_custom_call.1
$region0: #{tpu_custom_call.1}
  #allocation0 [shape = 'u32[]', space=smem, size = 0x4, offset = 0x4, fixed_abs, tag = 'smem constant byte address 0x4 - core index']
  #allocation1 [shape = 'u32[144,128]{1,0:T(1,128)}', space=vmem, size = 0x12000, scoped, tag = 'internal scratch']
  %s0 = inlined_call_operand.vmem [shape: f32[2,32,8], index: 0, kind: input, shape index: {}]
  %s1 = inlined_call_operand.hbm [shape: f32[2,8,32], index: 1, kind: output, shape index: {}]
  %s2 = sld [smem:[#allocation0]]
  $region37: #{tpu_custom_call.1} parent=0
    _
  %s4 = ssub.s32 1, %s2
  %s5 = scalar_select 0, %s4, %s2
  $region1: #{tpu_custom_call.1} parent=0
    #allocation2 [shape = 'u8[8192]{0}', space=vmem, size = 0x2000, scoped, tag = 'output window, operand 0']
    #allocation3 [shape = 's32[2]{0}', space=sflag, size = 0x8, scoped, tag = 'scoped memory for tpu_custom_call.1']
    %6 = vsyncpa [#allocation3], 0
    %s7 = scalar_lea.sflag [#allocation3], 1
    %8 = vsyncpa %s7, 0
    loop: start=0, step=1, limit=4
    $region2: #{tpu_custom_call.1} parent=1 // loop_pre_header
      _
    $region3: #{tpu_custom_call.1} parent=1 // loop_header
      %s10 = sphi 0, %s14
      %p11 = scmp.ge.s32.totalorder %s10, 4
      %s20 = sphi 0, %s22
      %s23 = sphi 0, %s20
      %s24 = sphi 0, %s23
      %s40 = sphi 0, %s24
      %s46 = sphi 0, %s48
      %s49 = sphi 0, %s46
      %s50 = sphi 0, %s49
      %s66 = sphi 0, %s50
    $region4: #{tpu_custom_call.1} parent=1 // loop_header_branch
      %13 = sbr.rel (%p11) target = $region8
    $region5: #{tpu_custom_call.1} parent=1 // loop_body
      %s15 = ssub.s32 %s10, 1
      %s16 = ssub.s32 %s10, 2
      %s17 = sadd.s32 %s10, 1
      %s18 = ssub.s32 %s10, %s17
      %p19 = scmp.eq.s32.totalorder %s18, 0
      %s21 = sadd.s32 %s20, 1
      %s22 = scalar_select %p19, %s20, %s21
      %p25 = pneg %p19
      %p26 = scmp.eq.s32.totalorder %s10, 1
      %p27 = por %p25, %p26
      %p28 = scmp.ne.s32.totalorder %s20, %s23
      %p29 = scmp.eq.s32.totalorder %s10, 0
      %p30 = por %p28, %p29
      %p31 = scmp.ne.s32.totalorder %s20, %s23
      %p32 = scmp.eq.s32.totalorder %s15, 1
      %p33 = por %p31, %p32
      %p34 = scmp.ne.s32.totalorder %s23, %s24
      %p35 = scmp.eq.s32.totalorder %s15, 0
      %p36 = por %p34, %p35
      %p37 = scmp.ne.s32.totalorder %s23, %s24
      %p38 = scmp.eq.s32.totalorder %s16, 1
      %p39 = por %p37, %p38
      %p41 = scmp.ne.s32.totalorder %s24, %s40
      %p42 = scmp.eq.s32.totalorder %s16, 0
      %p43 = por %p41, %p42
      %s44 = ssub.s32 %s10, %s17
      %p45 = scmp.eq.s32.totalorder %s44, 0
      %s47 = sadd.s32 %s46, 1
      %s48 = scalar_select %p45, %s46, %s47
      %p51 = pneg %p45
      %p52 = scmp.eq.s32.totalorder %s10, 1
      %p53 = por %p51, %p52
      %p54 = scmp.ne.s32.totalorder %s46, %s49
      %p55 = scmp.eq.s32.totalorder %s10, 0
      %p56 = por %p54, %p55
      %p57 = scmp.ne.s32.totalorder %s46, %s49
      %p58 = scmp.eq.s32.totalorder %s15, 1
      %p59 = por %p57, %p58
      %p60 = scmp.ne.s32.totalorder %s49, %s50
      %p61 = scmp.eq.s32.totalorder %s15, 0
      %p62 = por %p60, %p61
      %p63 = scmp.ne.s32.totalorder %s49, %s50
      %p64 = scmp.eq.s32.totalorder %s16, 1
      %p65 = por %p63, %p64
      %p67 = scmp.ne.s32.totalorder %s50, %s66
      %p68 = scmp.eq.s32.totalorder %s16, 0
      %p69 = por %p67, %p68
      %p70 = scmp.le.s32.totalorder 1, %s10
      %p71 = scmp.lt.s32.totalorder %s10, 3
      %p72 = pnand %p70, %p71
      %p73 = pneg %p72
      // Predicated region
      $region9: #{tpu_custom_call.1} parent=5 // pred_check
        _
      $region10: #{tpu_custom_call.1} parent=5 // pred_check_branch
        %75 = sbr.rel (%p72) target = $region12
      $region11: #{tpu_custom_call.1} parent=5 // pred_region
        %s76 = ssub.s32 %s10, 1
      $region12: #{tpu_custom_call.1} parent=5 // pred_fallthru
        _
      %p77 = scmp.lt.s32.totalorder %s10, 2
      // Predicated region
      $region13: #{tpu_custom_call.1} parent=5 // pred_check
        %p78 = pneg %p77
      $region14: #{tpu_custom_call.1} parent=5 // pred_check_branch
        %80 = sbr.rel (%p78) target = $region16
      $region15: #{tpu_custom_call.1} parent=5 // pred_region
        // Predicated region
        $region17: #{tpu_custom_call.1} parent=15 // pred_check
          %p81 = pneg %p30
        $region18: #{tpu_custom_call.1} parent=15 // pred_check_branch
          %83 = sbr.rel (%p81) target = $region20
        $region19: #{tpu_custom_call.1} parent=15 // pred_region
          %p84 = scmp.lt.s32.totalorder %s10, 1
          %s85 = scalar_select %p84, %s10, 1
          %s86 = smul.addr %s85, 4
          %s87 = smul.addr %s86, 8
          %s88 = scalar_lea.vmem %s0, %s87
        $region20: #{tpu_custom_call.1} parent=15 // pred_fallthru
          _
      $region16: #{tpu_custom_call.1} parent=5 // pred_fallthru
        _
      %p89 = scmp.le.s32.totalorder 1, %s10
      %p90 = scmp.lt.s32.totalorder %s10, 3
      %p91 = pnand %p89, %p90
      %p92 = pneg %p91
      // Predicated region
      $region21: #{tpu_custom_call.1} parent=5 // pred_check
        _
      $region22: #{tpu_custom_call.1} parent=5 // pred_check_branch
        %94 = sbr.rel (%p91) target = $region24
      $region23: #{tpu_custom_call.1} parent=5 // pred_region
        %s95 = ssub.s32 %s10, 1
        %p96 = scmp.lt.s32.totalorder %s15, 1
        %s97 = scalar_select %p96, %s15, 1
        %s98 = smul.addr %s97, 4
        %s99 = smul.addr %s98, 8
        %s100 = scalar_lea.vmem %s0, %s99
        %p101 = pneg %p36
        %p102 = pneg %p33
        %p103 = pneg %p62
        %p104 = pneg %p59
        %s105 = sand.u32 %s49, 1
        %s106 = scalar_lea.sflag [#allocation3], %s105
        %s107 = sand.u32 %s49, 1
        %s108 = smul.addr %s107, 8
        %s109 = scalar_lea.vmem [#allocation2], %s108
        %p110 = scmp.lt.s32.totalorder %s15, 1
        %s111 = scalar_select %p110, %s15, 1
        %s112 = smul.addr %s111, 4
        %s113 = smul.addr %s112, 8
        %s114 = scalar_lea.vmem %s0, %s113
        %v115 = vld [vmem:[%s114] sm:$0xff]
        %v116 = vld [vmem:[%s114 + $0x8] sm:$0xff]
        %v117 = vld [vmem:[%s114 + $0x10] sm:$0xff]
        %v118 = vld [vmem:[%s114 + $0x18] sm:$0xff]
        %119 = vxpose.xlu0.b32.start [1/16] %v115, 128
        %120 = vxpose.xlu0.b32.cont [2/16] %v116, 128
        %121 = vxpose.xlu0.b32.cont [3/16] %v117, 128
        %122 = vxpose.xlu0.b32.cont [4/16] %v118, 128
        %123 = vxpose.xlu0.b32.cont [5/16] 0.0, 128
        %124 = vxpose.xlu0.b32.cont [6/16] 0.0, 128
        %125 = vxpose.xlu0.b32.cont [7/16] 0.0, 128
        %126 = vxpose.xlu0.b32.cont [8/16] 0.0, 128
        %127 = vxpose.xlu0.b32.cont [9/16] 0.0, 128
        %128 = vxpose.xlu0.b32.cont [10/16] 0.0, 128
        %129 = vxpose.xlu0.b32.cont [11/16] 0.0, 128
        %130 = vxpose.xlu0.b32.cont [12/16] 0.0, 128
        %131 = vxpose.xlu0.b32.cont [13/16] 0.0, 128
        %132 = vxpose.xlu0.b32.cont [14/16] 0.0, 128
        %133 = vxpose.xlu0.b32.cont [15/16] 0.0, 128
        %134 = vxpose.xlu0.b32.end [16/16] 0.0, 128
        %v135 = vpop.trf.xlu0
        %v136 = vpop.trf.xlu0
        %v137 = vpop.trf.xlu0
        %v138 = vpop.trf.xlu0
        %v139 = vpop.trf.xlu0
        %v140 = vpop.trf.xlu0
        %v141 = vpop.trf.xlu0
        %v142 = vpop.trf.xlu0
        %v143 = vpop.trf.xlu0
        %v144 = vpop.trf.xlu0
        %v145 = vpop.trf.xlu0
        %v146 = vpop.trf.xlu0
        %v147 = vpop.trf.xlu0
        %v148 = vpop.trf.xlu0
        %v149 = vpop.trf.xlu0
        %v150 = vpop.trf.xlu0
        %v151 = vlaneseq
        %v152 = vand.u32 %v151, 127
        %v153 = vshra.s32 %v152, 1
        %v154 = vcvt.s32.f32 %v153
        %v155 = vmul.f32 %v154, -0.5756463
        %v156 = vmul.f32 %v155, 1.442695
        %v157 = vpow.pop %v156
        %v158 = vand.u32 %v152, 1
        %v159 = vcvt.s32.f32 %v158
        %v160 = vmul.f32 %v159, 1.5707964
        %v161 = vlaneseq
        %v162 = vshrl.u32 %v161, 7
        %v163 = vcvt.s32.f32 %v162
        %v164 = vmul.f32 %v163, %v157
        %v165 = vadd.f32 %v164, %v160
        %v166 = vand.u32 2147483647, %v165
        %vm167 = vcmp.le.f32.partialorder %v166, 0.7853982
        %vm168 = vcmp.lt.s32.totalorder %v165, 0
        %v169 = vand.u32 %v165, 2139095040
        %v170 = vshrl.u32 %v169, 23
        %v171 = vsub.s32 %v170, 127
        %v172 = vand.u32 2147483647, %v165
        %v173 = vand.u32 %v172, 8388607
        %v174 = vor.u32 %v173, 8388608
        %v175 = vsub.s32 0, %v174
        %v176 = vadd.s32 %v171, 1
        %vm177 = vcmp.gt.s32.totalorder %v176, 0
        %v178 = vsel %vm177, %v176, 0
        %v179 = vshrl.u32 %v178, 5
        %v180 = vand.u32 %v178, 31
        %v181 = vsub.s32 32, %v180
        %v182 = vshrl.u32 683565275, %v181
        %v183 = vshll.u32 683565275, %v180
        %v184 = vshrl.u32 2475754826, %v181
        %v185 = vor.u32 %v183, %v184
        %v186 = vshll.u32 2475754826, %v180
        %v187 = vshrl.u32 2131351028, %v181
        %v188 = vor.u32 %v186, %v187
        %v189 = vshll.u32 2131351028, %v180
        %v190 = vshrl.u32 2102212464, %v181
        %v191 = vor.u32 %v189, %v190
        %v192 = vshll.u32 2102212464, %v180
        %v193 = vshrl.u32 920167782, %v181
        %v194 = vor.u32 %v192, %v193
        %v195 = vshll.u32 920167782, %v180
        %v196 = vshrl.u32 1326507024, %v181
        %v197 = vor.u32 %v195, %v196
        %vm198 = vcmp.lt.s32.totalorder %v179, 1
        %vm199 = vcmp.lt.s32.totalorder %v179, 2
        %vm200 = vcmp.lt.s32.totalorder %v179, 3
        %vm201 = vcmp.lt.s32.totalorder %v179, 4
        %v202 = vsel %vm198, %v182, %v185
        %v203 = vsel %vm201, %v191, 2102212464
        %v204 = vsel %vm200, %v188, %v203
        %v205 = vsel %vm199, %v202, %v204
        %v206 = vsel %vm198, %v185, %v188
        %v207 = vsel %vm201, %v194, 920167782
        %v208 = vsel %vm200, %v191, %v207
        %v209 = vsel %vm199, %v206, %v208
        %v210 = vsel %vm198, %v188, %v191
        %v211 = vsel %vm201, %v197, 1326507024
        %v212 = vsel %vm200, %v194, %v211
        %v213 = vsel %vm199, %v210, %v212
        %v214 = vshll.u32 %v174, 8
        %v215 = vmul.u32.u64.compose %v214, %v213
        %v216 = vextract.low.u32 %v215
        %v217 = vextract.high.u32 %v215
        %v218 = vmul.u32.u64.compose %v214, %v209
        %v219 = vextract.low.u32 %v218
        %v220 = vextract.high.u32 %v218
        %v221 = vmul.u32 %v214, %v205
        %v222 = vadd.s32 %v217, %v219
        %vm223 = vc.u32 %v217, %v219
        %v224 = vadd.s32 %v220, 1
        %v225 = vsel %vm223, %v224, %v220
        %v226 = vadd.s32 %v221, %v225
        %v227 = vadd.s32 %v226, 536870912
        %v228 = vshrl.u32 %v227, 30
        %v229 = vshll.u32 %v228, 30
        %v230 = vsub.s32 %v226, %v229
        %vm231 = vcmp.lt.s32.totalorder %v230, 0
        %v232 = vsub.s32 0, %v230
        %v233 = vsel %vm231, %v232, %v230
        %v234 = vclz %v233
        %v235 = vsub.s32 %v234, 2
        %vm236 = vcmp.gt.s32.totalorder 0, %v235
        %v237 = vsel %vm236, 0, %v235
        %v238 = vsub.s32 32, %v237
        %v239 = vshll.u32 %v230, %v237
        %v240 = vshrl.u32 %v222, %v238
        %v241 = vor.u32 %v239, %v240
        %v242 = vsub.s32 4294967266, %v237
        %v243 = vadd.s32 %v242, 127
        %v244 = vshll.u32 %v243, 23
        %v245 = vor.u32 4788187, %v244
        %v246 = vand.u32 2147483647, %v245
        %v248 = vcvt.s32.f32 %v241
        %v249 = vmul.f32 %v248, %v246
        %v250 = vxor.u32 %v249, 2147483648
        %v251 = vsel %vm168, %v250, %v249
        %v252 = vsub.s32 4, %v228
        %v253 = vsel %vm168, %v252, %v228
        %v254 = vsel %vm167, %v165, %v251
        %v255 = vsel %vm167, 0, %v253
        %v256 = vcosq.f32.pop %v254
        %v257 = vsinq.f32.pop %v254
        %vm258 = vweird.f32 %v165
        %v259 = vadd.s32 %v255, 3
        %v260 = vand.u32 %v259, 3
        %vm261 = vcmp.lt.s32.totalorder %v260, 2
        %vm262 = vcmp.eq.s32.totalorder %v260, 0
        %v263 = vxor.u32 %v257, 2147483648
        %v264 = vsel %vm262, %v256, %v263
        %vm265 = vcmp.eq.s32.totalorder %v260, 2
        %v266 = vxor.u32 %v256, 2147483648
        %v267 = vsel %vm265, %v266, %v257
        %v268 = vsel %vm261, %v264, %v267
        %v269 = vsel %vm258, nan, %v268
        %v270 = vadd.f32 %v135, %v269
        %vm271 = vcmask 261120
        %272 = vst.msk [vmem:[%s109] sm:$0xff] %vm271, %v270
        %s273 = sand.u32 %s49, 1
        %s274 = scalar_lea.sflag [#allocation3], %s273
        %s275 = sand.u32 %s49, 1
        %s276 = smul.addr %s275, 8
        %s277 = scalar_lea.vmem [#allocation2], %s276
        // Predicated region
        $region25: #{tpu_custom_call.1} parent=23 // pred_check
          %p278 = pneg %p59
        $region26: #{tpu_custom_call.1} parent=23 // pred_check_branch
          %280 = sbr.rel (%p278) target = $region28
        $region27: #{tpu_custom_call.1} parent=23 // pred_region
          %s282 = ssub.s32 128, 128
          %283 = vsyncadd %s274, %s282
          %s284 = smul.addr %s15, 128
          %s285 = scalar_lea.hbm %s1, %s284
          %s287 = sshll.u32 %s277, 4
          %s288 = int_to_ptr.vmem [resolvable:$true] %s287
          %290 = dma.vmem_to_hbm [thread:$0]  %s288, 128, %s285, %s274
        $region28: #{tpu_custom_call.1} parent=23 // pred_fallthru
          _
      $region24: #{tpu_custom_call.1} parent=5 // pred_fallthru
        _
      %p291 = scmp.le.s32.totalorder 2, %s10
      // Predicated region
      $region29: #{tpu_custom_call.1} parent=5 // pred_check
        %p292 = pneg %p291
      $region30: #{tpu_custom_call.1} parent=5 // pred_check_branch
        %294 = sbr.rel (%p292) target = $region32
      $region31: #{tpu_custom_call.1} parent=5 // pred_region
        %s295 = ssub.s32 %s10, 2
        // Predicated region
        $region33: #{tpu_custom_call.1} parent=31 // pred_check
          %p296 = pneg %p65
        $region34: #{tpu_custom_call.1} parent=31 // pred_check_branch
          %298 = sbr.rel (%p296) target = $region36
        $region35: #{tpu_custom_call.1} parent=31 // pred_region
          %s299 = sand.u32 %s50, 1
          %s300 = scalar_lea.sflag [#allocation3], %s299
          %s301 = sand.u32 %s50, 1
          %s302 = smul.addr %s301, 8
          %s303 = scalar_lea.vmem [#allocation2], %s302
          %304 = dma.done %s300, 128
        $region36: #{tpu_custom_call.1} parent=31 // pred_fallthru
          _
      $region32: #{tpu_custom_call.1} parent=5 // pred_fallthru
        _
    $region6: #{tpu_custom_call.1} parent=1 // loop_footer
      %s14 = sadd.s32 1, %s10
    $region7: #{tpu_custom_call.1} parent=1 // loop_footer_branch
      %9 = sbr.rel target = $region3
    $region8: #{tpu_custom_call.1} parent=1 // loop_exit
      _
    %305 = vsyncpa [#allocation3], 1
    %s306 = scalar_lea.sflag [#allocation3], 1
    %307 = vsyncpa %s306, 1

</llo_original>
